<compile_context>
chip_gen: v5e
topology: v5e:2x2
jax: 0.10.0
libtpu: 0.0.40
codegen_flags: <defaults>
</compile_context>

<pallas_src>
import functools

import jax
import jax.numpy as jnp
from jax.experimental import pallas as pl
from jax.experimental.pallas import tpu as pltpu


def _conv_band_blocks(w_oihw, W):
    """(Cout,Cin,3,3) OIHW conv weights -> (3, Cin*W, Cout*W) banded K-blocks.

    Block ky maps the row-(y+ky-1) slab (lane = c*W + x_in) to the output slab
    (lane = o*W + x_out):
        M[ky][c*W + x_in, o*W + x_out] = w[o, c, ky, x_in - x_out + 1]
    (zero outside the band), which bakes the horizontal 'same' zero padding in.
    """
    cout, cin, kh, kw = w_oihw.shape
    assert kh == 3 and kw == 3
    w = jnp.transpose(w_oihw, (2, 3, 1, 0))            # OIHW -> HWIO (3,3,Cin,Cout)
    xi = jnp.arange(W)
    kx = xi[:, None] - xi[None, :] + 1                 # (x_in, x_out) -> kernel column
    valid = (kx >= 0) & (kx <= 2)
    kxc = jnp.clip(kx, 0, 2)
    blocks = []
    for ky in range(3):
        tap = w[ky][kxc]                               # (W, W, Cin, Cout), idx (x_in, x_out)
        tap = jnp.where(valid[:, :, None, None], tap, 0.0)
        # rows = (c, x_in), cols = (o, x_out)
        blocks.append(tap.transpose(2, 0, 3, 1).reshape(cin * W, cout * W))
    return jnp.stack(blocks, axis=0)                   # (3, Cin*W, Cout*W)


def residual_soft_connection(x, alfa, bn1, w1, b1, bn2, w2, b2, *,
                             eps=1e-5, weights_dtype=jnp.float32, target_rows=256):
    """Forward pass of Residual_Soft_Connection (inference-mode BatchNorm).

    x: (B, C, H, W) NCHW, alfa: (B, C, 1, 1), conv weights OIHW (like torch),
    bn* = (gamma, beta, running_mean, running_var).  Use target_rows=128 on v5e.
    """
    B, C, H, W = x.shape
    C1, C2 = w1.shape[0], w2.shape[0]
    assert C1 == C // 2 and C2 == C // 4 and C1 + 2 * C2 == C
    assert H % 8 == 0, "sublane tiling assumes H is a multiple of 8"
    CW, C1W, C2W = C * W, C1 * W, C2 * W

    # Images per grid step: fill the MXU M dimension and amortize per-step overhead.
    # (At production batch this leaves >=2 'parallel' grid steps for v7x's two TCs.)
    TB = 1
    for t in range(1, B + 1):
        if B % t == 0 and t * H <= target_rows:
            TB = t
    TBH = TB * H
    grid = (B // TB,)

    # --- fold BatchNorm (inference) into per-channel scale/shift ---
    g1, be1, rm1, rv1 = bn1
    g2, be2, rm2, rv2 = bn2
    s1 = g1 * jax.lax.rsqrt(rv1 + eps)
    s2 = g2 * jax.lax.rsqrt(rv2 + eps)
    bn1_scale, bn1_shift = s1, be1 - rm1 * s1
    bn2_scale, bn2_shift = s2, be2 - rm2 * s2

    # --- wrapper-side layout plumbing: channel-planar slabs (lane = c*W + x) ---
    # NOTE: this NCHW->planar transpose (and the inverse on the output) are full-tensor
    # relayouts outside the kernel; if adjacent ops can consume the planar layout, keep
    # it end-to-end and drop both transposes.
    x_slab = jnp.transpose(x, (0, 2, 1, 3)).reshape(B * H, CW)
    # Alfa stays tiny: (B, 1, C*W); the broadcast over H rows happens in-kernel.
    alfa_rows = jnp.repeat(alfa.reshape(B, C), W, axis=1).reshape(B, 1, CW)

    def row(v):                                        # per-channel vector -> (1, Cn*W)
        return jnp.repeat(v, W)[None, :]

    bn1s_row, bn1b_row = row(bn1_scale), row(bn1_shift)
    bn2s_row, bn2b_row = row(bn2_scale), row(bn2_shift)
    b1_row = row(b1)

    m1k = _conv_band_blocks(w1, W).astype(weights_dtype)             # (3, C*W,  C1*W)
    m2k = _conv_band_blocks(w2, W)                                   # (3, C1*W, C2*W)
    # duplicate conv2 output columns so the kernel emits cat([out2, out2]) lane-aligned
    m2k = jnp.concatenate([m2k, m2k], axis=2).astype(weights_dtype)  # (3, C1*W, 2*C2*W)
    b2_row = jnp.concatenate([row(b2), row(b2)], axis=1)

    def kernel(x_ref, alfa_ref, bn1s_ref, bn1b_ref, m1_ref, b1_ref,
               bn2s_ref, bn2b_ref, m2_ref, b2_ref, out_ref):
        x = x_ref[...]                                               # (TBH, CW) f32

        def conv3x3(h, m_ref, bias_row):
            # 3x3 'same' conv = 3 accumulated K-block matmuls.  Vertical row shifts are
            # XLU rolls; the per-image boundary mask realizes the vertical zero padding
            # and isolates the TB images stacked in this block.
            y = jax.lax.broadcasted_iota(jnp.int32, h.shape, 0) % H
            hu = jnp.where(y != 0, pltpu.roll(h, shift=1, axis=0), 0.0)            # row y-1
            hd = jnp.where(y != H - 1, pltpu.roll(h, shift=TBH - 1, axis=0), 0.0)  # row y+1
            acc = jnp.dot(hu.astype(weights_dtype), m_ref[0],
                          preferred_element_type=jnp.float32)
            acc = acc + jnp.dot(h.astype(weights_dtype), m_ref[1],
                                preferred_element_type=jnp.float32)
            acc = acc + jnp.dot(hd.astype(weights_dtype), m_ref[2],
                                preferred_element_type=jnp.float32)
            return acc + bias_row

        # stage 1: BN1 -> ReLU -> Conv1
        h1 = jnp.maximum(x * bn1s_ref[...] + bn1b_ref[...], 0.0)
        out1 = conv3x3(h1, m1_ref, b1_ref[...])                      # (TBH, C1*W)

        # stage 2: BN2 -> ReLU -> Conv2 (output columns pre-duplicated in m2k/b2_row)
        h2 = jnp.maximum(out1 * bn2s_ref[...] + bn2b_ref[...], 0.0)
        out2x2 = conv3x3(h2, m2_ref, b2_ref[...])                    # (TBH, 2*C2*W)

        # residual: X * Alfa; alfa broadcast from (TB, 1, CW) over the H rows per image.
        a = alfa_ref[...]                                            # (TB, 1, CW)
        scaled = x * jnp.broadcast_to(a, (TB, H, CW)).reshape(TBH, CW)

        # cat([out1, out2, out2], channel) + X*Alfa -- one unmasked full-width store.
        out_ref[...] = jnp.concatenate([out1, out2x2], axis=-1) + scaled

    def const_spec(a):
        # Constants: block index never changes.  (At production scale also consider
        # pipeline_mode=pl.Buffered(1) here to drop their second pipeline buffer.)
        return pl.BlockSpec(a.shape, lambda b, n=a.ndim: (0,) * n)

    in_specs = [
        pl.BlockSpec((TBH, CW), lambda b: (b, 0)),        # x slab: TB images per step
        pl.BlockSpec((TB, 1, CW), lambda b: (b, 0, 0)),   # alfa rows (per image, channel)
        const_spec(bn1s_row), const_spec(bn1b_row),
        const_spec(m1k), const_spec(b1_row),
        const_spec(bn2s_row), const_spec(bn2b_row),
        const_spec(m2k), const_spec(b2_row),
    ]

    out_slab = pl.pallas_call(
        kernel,
        grid=grid,
        in_specs=in_specs,
        out_specs=pl.BlockSpec((TBH, CW), lambda b: (b, 0)),
        out_shape=jax.ShapeDtypeStruct((B * H, CW), jnp.float32),
        compiler_params=pltpu.CompilerParams(
            dimension_semantics=("parallel",)),           # batch-block axis -> megacore split
    )(x_slab, alfa_rows, bn1s_row, bn1b_row, m1k, b1_row,
      bn2s_row, bn2b_row, m2k, b2_row)

    # planar slab -> NCHW (full-tensor relayout outside the kernel; see note above)
    return jnp.transpose(out_slab.reshape(B, H, C, W), (0, 2, 1, 3))


def reference(x, alfa, bn1, w1, b1, bn2, w2, b2, eps=1e-5):
    """Pure-JAX (inference-mode BN) reference of the same forward pass, NCHW/OIHW."""
    def bn(h, params):
        g, be, rm, rv = params
        s = g * jax.lax.rsqrt(rv + eps)
        return h * s.reshape(1, -1, 1, 1) + (be - rm * s).reshape(1, -1, 1, 1)

    def conv(h, w, b):
        y = jax.lax.conv_general_dilated(
            h, w, window_strides=(1, 1), padding="SAME",
            dimension_numbers=("NCHW", "OIHW", "NCHW"),
            precision=jax.lax.Precision.HIGHEST)
        return y + b.reshape(1, -1, 1, 1)

    scaled = x * alfa
    out1 = conv(jax.nn.relu(bn(x, bn1)), w1, b1)
    out2 = conv(jax.nn.relu(bn(out1, bn2)), w2, b2)
    # out3 (BN3/ReLU/Conv3) never affects the module's returned tensor.
    return jnp.concatenate([out1, out2, out2], axis=1) + scaled


if __name__ == "__main__":
    key = jax.random.PRNGKey(0)
    B, C, H, W = 2, 16, 16, 16            # batch_size=2, input_dim=16, 16x16 spatial
    C1, C2 = C // 2, C // 4
    ks = list(jax.random.split(key, 14))

    # torch-layout inputs: X is NCHW, Alfa is (B, C, 1, 1), conv weights OIHW
    x = jax.random.normal(ks[0], (B, C, H, W), jnp.float32)
    alfa = jax.random.normal(ks[1], (B, C, 1, 1), jnp.float32)

    g1 = 1.0 + 0.1 * jax.random.normal(ks[2], (C,), jnp.float32)
    be1 = 0.1 * jax.random.normal(ks[3], (C,), jnp.float32)
    rm1 = 0.1 * jax.random.normal(ks[4], (C,), jnp.float32)
    rv1 = jax.random.uniform(ks[5], (C,), jnp.float32, minval=0.5, maxval=1.5)
    bn1 = (g1, be1, rm1, rv1)

    w1 = 0.1 * jax.random.normal(ks[6], (C1, C, 3, 3), jnp.float32)
    b1 = 0.1 * jax.random.normal(ks[7], (C1,), jnp.float32)

    g2 = 1.0 + 0.1 * jax.random.normal(ks[8], (C1,), jnp.float32)
    be2 = 0.1 * jax.random.normal(ks[9], (C1,), jnp.float32)
    rm2 = 0.1 * jax.random.normal(ks[10], (C1,), jnp.float32)
    rv2 = jax.random.uniform(ks[11], (C1,), jnp.float32, minval=0.5, maxval=1.5)
    bn2 = (g2, be2, rm2, rv2)

    w2 = 0.1 * jax.random.normal(ks[12], (C2, C1, 3, 3), jnp.float32)
    b2 = 0.1 * jax.random.normal(ks[13], (C2,), jnp.float32)

    args = (x, alfa, bn1, w1, b1, bn2, w2, b2)
    ref = jax.block_until_ready(reference(*args))

    run_f32 = jax.jit(functools.partial(residual_soft_connection,
                                        weights_dtype=jnp.float32))
    run_bf16 = jax.jit(functools.partial(residual_soft_connection,
                                         weights_dtype=jnp.bfloat16))

    out_f32 = jax.block_until_ready(run_f32(*args))
    out_bf16 = jax.block_until_ready(run_bf16(*args))

    assert out_f32.shape == (B, C, H, W) and out_bf16.shape == (B, C, H, W)
    err_f32 = float(jnp.max(jnp.abs(out_f32 - ref)))
    err_bf16 = float(jnp.max(jnp.abs(out_bf16 - ref)))
    assert err_f32 < 1e-3, f"f32 max abs error {err_f32}"
    # bf16 weights + activations at the MXU with f32 accumulation: ~2^-9 relative per
    # operand over O(100)-term sums -> max abs error ~1e-2 at these magnitudes.
    assert err_bf16 < 5e-2, f"bf16 max abs error {err_bf16}"
    print("KERNEL_OK")
</pallas_src>

<mosaic_0001>
module attributes {stable_mosaic.version = 11 : i64} {
  func.func @kernel(%arg0: i32, %arg1: memref<32x256xf32, #tpu.memory_space<vmem>>, %arg2: memref<2x1x256xf32, #tpu.memory_space<vmem>>, %arg3: memref<1x256xf32, #tpu.memory_space<vmem>>, %arg4: memref<1x256xf32, #tpu.memory_space<vmem>>, %arg5: memref<3x256x128xf32, #tpu.memory_space<vmem>>, %arg6: memref<1x128xf32, #tpu.memory_space<vmem>>, %arg7: memref<1x128xf32, #tpu.memory_space<vmem>>, %arg8: memref<1x128xf32, #tpu.memory_space<vmem>>, %arg9: memref<3x128x128xf32, #tpu.memory_space<vmem>>, %arg10: memref<1x128xf32, #tpu.memory_space<vmem>>, %arg11: memref<32x256xf32, #tpu.memory_space<vmem>>) attributes {dimension_semantics = [#tpu.dimension_semantics<parallel>], iteration_bounds = array<i64: 1>, scalar_prefetch = 0 : i64, scratch_operands = 0 : i64, tpu.core_type = #tpu.core_type<tc>, window_params = [{transform_indices = @transform_0, window_bounds = array<i64: 32, 256>}, {transform_indices = @transform_1, window_bounds = array<i64: 2, 1, 256>}, {pipeline_mode = #tpu.pipeline_mode<synchronous>, transform_indices = @transform_2, window_bounds = array<i64: 1, 256>}, {pipeline_mode = #tpu.pipeline_mode<synchronous>, transform_indices = @transform_3, window_bounds = array<i64: 1, 256>}, {pipeline_mode = #tpu.pipeline_mode<synchronous>, transform_indices = @transform_4, window_bounds = array<i64: 3, 256, 128>}, {pipeline_mode = #tpu.pipeline_mode<synchronous>, transform_indices = @transform_5, window_bounds = array<i64: 1, 128>}, {pipeline_mode = #tpu.pipeline_mode<synchronous>, transform_indices = @transform_6, window_bounds = array<i64: 1, 128>}, {pipeline_mode = #tpu.pipeline_mode<synchronous>, transform_indices = @transform_7, window_bounds = array<i64: 1, 128>}, {pipeline_mode = #tpu.pipeline_mode<synchronous>, transform_indices = @transform_8, window_bounds = array<i64: 3, 128, 128>}, {pipeline_mode = #tpu.pipeline_mode<synchronous>, transform_indices = @transform_9, window_bounds = array<i64: 1, 128>}, {transform_indices = @transform_10, window_bounds = array<i64: 32, 256>}]} {
    %c0 = arith.constant 0 : index
    %c0_0 = arith.constant 0 : index
    %0 = vector.load %arg1[%c0, %c0_0] : memref<32x256xf32, #tpu.memory_space<vmem>>, vector<32x256xf32>
    %c0_1 = arith.constant 0 : index
    %c0_2 = arith.constant 0 : index
    %1 = vector.load %arg3[%c0_1, %c0_2] : memref<1x256xf32, #tpu.memory_space<vmem>>, vector<1x256xf32>
    %2 = vector.broadcast %1 : vector<1x256xf32> to vector<32x256xf32>
    %3 = arith.mulf %0, %2 : vector<32x256xf32>
    %c0_3 = arith.constant 0 : index
    %c0_4 = arith.constant 0 : index
    %4 = vector.load %arg4[%c0_3, %c0_4] : memref<1x256xf32, #tpu.memory_space<vmem>>, vector<1x256xf32>
    %5 = vector.broadcast %4 : vector<1x256xf32> to vector<32x256xf32>
    %6 = arith.addf %3, %5 : vector<32x256xf32>
    %cst = arith.constant 0.000000e+00 : f32
    %7 = vector.broadcast %cst : f32 to vector<32x256xf32>
    %8 = arith.maximumf %6, %7 : vector<32x256xf32>
    %c0_5 = arith.constant 0 : index
    %c0_6 = arith.constant 0 : index
    %9 = vector.load %arg6[%c0_5, %c0_6] : memref<1x128xf32, #tpu.memory_space<vmem>>, vector<1x128xf32>
    %10 = tpu.iota {dimensions = array<i32: 0>} : vector<32x256xi32>
    %c16_i32 = arith.constant 16 : i32
    %c0_i32 = arith.constant 0 : i32
    %11 = arith.cmpi eq, %c16_i32, %c0_i32 : i32
    %c1_i32 = arith.constant 1 : i32
    %12 = arith.select %11, %c1_i32, %c16_i32 : i32
    %13 = vector.broadcast %12 : i32 to vector<32x256xi32>
    %14 = arith.remsi %10, %13 : vector<32x256xi32>
    %c0_i32_7 = arith.constant 0 : i32
    %15 = vector.broadcast %c0_i32_7 : i32 to vector<32x256xi32>
    %16 = arith.cmpi ne, %14, %15 : vector<32x256xi32>
    %c0_i32_8 = arith.constant 0 : i32
    %17 = vector.broadcast %c0_i32_8 : i32 to vector<32x256xi32>
    %18 = arith.cmpi slt, %14, %17 : vector<32x256xi32>
    %c0_i32_9 = arith.constant 0 : i32
    %19 = arith.cmpi slt, %12, %c0_i32_9 : i32
    %20 = vector.broadcast %19 : i1 to vector<32x256xi1>
    %21 = vector.broadcast %20 : vector<32x256xi1> to vector<32x256xi1>
    %22 = arith.xori %18, %21 : vector<32x256xi1>
    %23 = arith.andi %22, %16 : vector<32x256xi1>
    %24 = vector.broadcast %12 : i32 to vector<32x256xi32>
    %25 = arith.addi %14, %24 : vector<32x256xi32>
    %26 = arith.select %23, %25, %14 : vector<32x256xi1>, vector<32x256xi32>
    %c0_i32_10 = arith.constant 0 : i32
    %27 = vector.broadcast %c0_i32_10 : i32 to vector<32x256xi32>
    %28 = arith.cmpi ne, %26, %27 : vector<32x256xi32>
    %c1_i32_11 = arith.constant 1 : i32
    %29 = tpu.dynamic_rotate %8 by %c1_i32_11 dim 0 : vector<32x256xf32>, i32 -> vector<32x256xf32>
    %cst_12 = arith.constant 0.000000e+00 : f32
    %30 = vector.broadcast %cst_12 : f32 to vector<32x256xf32>
    %31 = arith.select %28, %29, %30 : vector<32x256xi1>, vector<32x256xf32>
    %c15_i32 = arith.constant 15 : i32
    %32 = vector.broadcast %c15_i32 : i32 to vector<32x256xi32>
    %33 = arith.cmpi ne, %26, %32 : vector<32x256xi32>
    %c31_i32 = arith.constant 31 : i32
    %34 = tpu.dynamic_rotate %8 by %c31_i32 dim 0 : vector<32x256xf32>, i32 -> vector<32x256xf32>
    %cst_13 = arith.constant 0.000000e+00 : f32
    %35 = vector.broadcast %cst_13 : f32 to vector<32x256xf32>
    %36 = arith.select %33, %34, %35 : vector<32x256xi1>, vector<32x256xf32>
    %c0_14 = arith.constant 0 : index
    %c0_15 = arith.constant 0 : index
    %c0_16 = arith.constant 0 : index
    %37 = vector.load %arg5[%c0_14, %c0_15, %c0_16] : memref<3x256x128xf32, #tpu.memory_space<vmem>>, vector<1x256x128xf32>
    %38 = vector.shape_cast %37 : vector<1x256x128xf32> to vector<256x128xf32>
    %cst_17 = arith.constant dense<0.000000e+00> : vector<32x128xf32>
    %39 = tpu.matmul %31, %38, %cst_17 {dimension_numbers = #tpu.dot_dimension_numbers<[1], [0], [0], [1], [0, 0, 1, 1], [], []>} : vector<32x256xf32>, vector<256x128xf32>, vector<32x128xf32> -> vector<32x128xf32>
    %c1 = arith.constant 1 : index
    %c0_18 = arith.constant 0 : index
    %c0_19 = arith.constant 0 : index
    %40 = vector.load %arg5[%c1, %c0_18, %c0_19] : memref<3x256x128xf32, #tpu.memory_space<vmem>>, vector<1x256x128xf32>
    %41 = vector.shape_cast %40 : vector<1x256x128xf32> to vector<256x128xf32>
    %cst_20 = arith.constant dense<0.000000e+00> : vector<32x128xf32>
    %42 = tpu.matmul %8, %41, %cst_20 {dimension_numbers = #tpu.dot_dimension_numbers<[1], [0], [0], [1], [0, 0, 1, 1], [], []>} : vector<32x256xf32>, vector<256x128xf32>, vector<32x128xf32> -> vector<32x128xf32>
    %43 = arith.addf %39, %42 : vector<32x128xf32>
    %c2 = arith.constant 2 : index
    %c0_21 = arith.constant 0 : index
    %c0_22 = arith.constant 0 : index
    %44 = vector.load %arg5[%c2, %c0_21, %c0_22] : memref<3x256x128xf32, #tpu.memory_space<vmem>>, vector<1x256x128xf32>
    %45 = vector.shape_cast %44 : vector<1x256x128xf32> to vector<256x128xf32>
    %cst_23 = arith.constant dense<0.000000e+00> : vector<32x128xf32>
    %46 = tpu.matmul %36, %45, %cst_23 {dimension_numbers = #tpu.dot_dimension_numbers<[1], [0], [0], [1], [0, 0, 1, 1], [], []>} : vector<32x256xf32>, vector<256x128xf32>, vector<32x128xf32> -> vector<32x128xf32>
    %47 = arith.addf %43, %46 : vector<32x128xf32>
    %48 = vector.broadcast %9 : vector<1x128xf32> to vector<32x128xf32>
    %49 = arith.addf %47, %48 : vector<32x128xf32>
    %c0_24 = arith.constant 0 : index
    %c0_25 = arith.constant 0 : index
    %50 = vector.load %arg7[%c0_24, %c0_25] : memref<1x128xf32, #tpu.memory_space<vmem>>, vector<1x128xf32>
    %51 = vector.broadcast %50 : vector<1x128xf32> to vector<32x128xf32>
    %52 = arith.mulf %49, %51 : vector<32x128xf32>
    %c0_26 = arith.constant 0 : index
    %c0_27 = arith.constant 0 : index
    %53 = vector.load %arg8[%c0_26, %c0_27] : memref<1x128xf32, #tpu.memory_space<vmem>>, vector<1x128xf32>
    %54 = vector.broadcast %53 : vector<1x128xf32> to vector<32x128xf32>
    %55 = arith.addf %52, %54 : vector<32x128xf32>
    %cst_28 = arith.constant 0.000000e+00 : f32
    %56 = vector.broadcast %cst_28 : f32 to vector<32x128xf32>
    %57 = arith.maximumf %55, %56 : vector<32x128xf32>
    %c0_29 = arith.constant 0 : index
    %c0_30 = arith.constant 0 : index
    %58 = vector.load %arg10[%c0_29, %c0_30] : memref<1x128xf32, #tpu.memory_space<vmem>>, vector<1x128xf32>
    %59 = tpu.iota {dimensions = array<i32: 0>} : vector<32x128xi32>
    %c16_i32_31 = arith.constant 16 : i32
    %c0_i32_32 = arith.constant 0 : i32
    %60 = arith.cmpi eq, %c16_i32_31, %c0_i32_32 : i32
    %c1_i32_33 = arith.constant 1 : i32
    %61 = arith.select %60, %c1_i32_33, %c16_i32_31 : i32
    %62 = vector.broadcast %61 : i32 to vector<32x128xi32>
    %63 = arith.remsi %59, %62 : vector<32x128xi32>
    %c0_i32_34 = arith.constant 0 : i32
    %64 = vector.broadcast %c0_i32_34 : i32 to vector<32x128xi32>
    %65 = arith.cmpi ne, %63, %64 : vector<32x128xi32>
    %c0_i32_35 = arith.constant 0 : i32
    %66 = vector.broadcast %c0_i32_35 : i32 to vector<32x128xi32>
    %67 = arith.cmpi slt, %63, %66 : vector<32x128xi32>
    %c0_i32_36 = arith.constant 0 : i32
    %68 = arith.cmpi slt, %61, %c0_i32_36 : i32
    %69 = vector.broadcast %68 : i1 to vector<32x128xi1>
    %70 = vector.broadcast %69 : vector<32x128xi1> to vector<32x128xi1>
    %71 = arith.xori %67, %70 : vector<32x128xi1>
    %72 = arith.andi %71, %65 : vector<32x128xi1>
    %73 = vector.broadcast %61 : i32 to vector<32x128xi32>
    %74 = arith.addi %63, %73 : vector<32x128xi32>
    %75 = arith.select %72, %74, %63 : vector<32x128xi1>, vector<32x128xi32>
    %c0_i32_37 = arith.constant 0 : i32
    %76 = vector.broadcast %c0_i32_37 : i32 to vector<32x128xi32>
    %77 = arith.cmpi ne, %75, %76 : vector<32x128xi32>
    %c1_i32_38 = arith.constant 1 : i32
    %78 = tpu.dynamic_rotate %57 by %c1_i32_38 dim 0 : vector<32x128xf32>, i32 -> vector<32x128xf32>
    %cst_39 = arith.constant 0.000000e+00 : f32
    %79 = vector.broadcast %cst_39 : f32 to vector<32x128xf32>
    %80 = arith.select %77, %78, %79 : vector<32x128xi1>, vector<32x128xf32>
    %c15_i32_40 = arith.constant 15 : i32
    %81 = vector.broadcast %c15_i32_40 : i32 to vector<32x128xi32>
    %82 = arith.cmpi ne, %75, %81 : vector<32x128xi32>
    %c31_i32_41 = arith.constant 31 : i32
    %83 = tpu.dynamic_rotate %57 by %c31_i32_41 dim 0 : vector<32x128xf32>, i32 -> vector<32x128xf32>
    %cst_42 = arith.constant 0.000000e+00 : f32
    %84 = vector.broadcast %cst_42 : f32 to vector<32x128xf32>
    %85 = arith.select %82, %83, %84 : vector<32x128xi1>, vector<32x128xf32>
    %c0_43 = arith.constant 0 : index
    %c0_44 = arith.constant 0 : index
    %c0_45 = arith.constant 0 : index
    %86 = vector.load %arg9[%c0_43, %c0_44, %c0_45] : memref<3x128x128xf32, #tpu.memory_space<vmem>>, vector<1x128x128xf32>
    %87 = vector.shape_cast %86 : vector<1x128x128xf32> to vector<128x128xf32>
    %cst_46 = arith.constant dense<0.000000e+00> : vector<32x128xf32>
    %88 = tpu.matmul %80, %87, %cst_46 {dimension_numbers = #tpu.dot_dimension_numbers<[1], [0], [0], [1], [0, 0, 1, 1], [], []>} : vector<32x128xf32>, vector<128x128xf32>, vector<32x128xf32> -> vector<32x128xf32>
    %c1_47 = arith.constant 1 : index
    %c0_48 = arith.constant 0 : index
    %c0_49 = arith.constant 0 : index
    %89 = vector.load %arg9[%c1_47, %c0_48, %c0_49] : memref<3x128x128xf32, #tpu.memory_space<vmem>>, vector<1x128x128xf32>
    %90 = vector.shape_cast %89 : vector<1x128x128xf32> to vector<128x128xf32>
    %cst_50 = arith.constant dense<0.000000e+00> : vector<32x128xf32>
    %91 = tpu.matmul %57, %90, %cst_50 {dimension_numbers = #tpu.dot_dimension_numbers<[1], [0], [0], [1], [0, 0, 1, 1], [], []>} : vector<32x128xf32>, vector<128x128xf32>, vector<32x128xf32> -> vector<32x128xf32>
    %92 = arith.addf %88, %91 : vector<32x128xf32>
    %c2_51 = arith.constant 2 : index
    %c0_52 = arith.constant 0 : index
    %c0_53 = arith.constant 0 : index
    %93 = vector.load %arg9[%c2_51, %c0_52, %c0_53] : memref<3x128x128xf32, #tpu.memory_space<vmem>>, vector<1x128x128xf32>
    %94 = vector.shape_cast %93 : vector<1x128x128xf32> to vector<128x128xf32>
    %cst_54 = arith.constant dense<0.000000e+00> : vector<32x128xf32>
    %95 = tpu.matmul %85, %94, %cst_54 {dimension_numbers = #tpu.dot_dimension_numbers<[1], [0], [0], [1], [0, 0, 1, 1], [], []>} : vector<32x128xf32>, vector<128x128xf32>, vector<32x128xf32> -> vector<32x128xf32>
    %96 = arith.addf %92, %95 : vector<32x128xf32>
    %97 = vector.broadcast %58 : vector<1x128xf32> to vector<32x128xf32>
    %98 = arith.addf %96, %97 : vector<32x128xf32>
    %c0_55 = arith.constant 0 : index
    %c0_56 = arith.constant 0 : index
    %c0_57 = arith.constant 0 : index
    %99 = vector.load %arg2[%c0_55, %c0_56, %c0_57] : memref<2x1x256xf32, #tpu.memory_space<vmem>>, vector<2x1x256xf32>
    %100 = vector.shape_cast %99 : vector<2x1x256xf32> to vector<2x1x256xf32>
    %101 = vector.broadcast %100 : vector<2x1x256xf32> to vector<2x16x256xf32>
    %102 = vector.shape_cast %101 : vector<2x16x256xf32> to vector<32x256xf32>
    %103 = arith.mulf %0, %102 : vector<32x256xf32>
    %104 = tpu.concatenate %49, %98 in 1 : vector<32x128xf32>, vector<32x128xf32> -> vector<32x256xf32>
    %105 = arith.addf %104, %103 : vector<32x256xf32>
    %c0_58 = arith.constant 0 : index
    %c0_59 = arith.constant 0 : index
    %106 = vector.load %arg11[%c0_58, %c0_59] : memref<32x256xf32, #tpu.memory_space<vmem>>, vector<32x256xf32>
    tpu.vector_store %arg11[%c0_58, %c0_59], %105 {strides = array<i32>} : memref<32x256xf32, #tpu.memory_space<vmem>>, vector<32x256xf32>,
    return
  }
  func.func @transform_0(%arg0: i32) -> (i32, i32) {
    %c0_i32 = arith.constant 0 : i32
    %c0_i32_0 = arith.constant 0 : i32
    return %arg0, %c0_i32 : i32, i32
  }
  func.func @transform_1(%arg0: i32) -> (i32, i32, i32) {
    %c0_i32 = arith.constant 0 : i32
    %c0_i32_0 = arith.constant 0 : i32
    %c0_i32_1 = arith.constant 0 : i32
    return %arg0, %c0_i32, %c0_i32_0 : i32, i32, i32
  }
  func.func @transform_2(%arg0: i32) -> (i32, i32) {
    %c0_i32 = arith.constant 0 : i32
    %c0_i32_0 = arith.constant 0 : i32
    %c0_i32_1 = arith.constant 0 : i32
    return %c0_i32, %c0_i32_0 : i32, i32
  }
  func.func @transform_3(%arg0: i32) -> (i32, i32) {
    %c0_i32 = arith.constant 0 : i32
    %c0_i32_0 = arith.constant 0 : i32
    %c0_i32_1 = arith.constant 0 : i32
    return %c0_i32, %c0_i32_0 : i32, i32
  }
  func.func @transform_4(%arg0: i32) -> (i32, i32, i32) {
    %c0_i32 = arith.constant 0 : i32
    %c0_i32_0 = arith.constant 0 : i32
    %c0_i32_1 = arith.constant 0 : i32
    %c0_i32_2 = arith.constant 0 : i32
    return %c0_i32, %c0_i32_0, %c0_i32_1 : i32, i32, i32
  }
  func.func @transform_5(%arg0: i32) -> (i32, i32) {
    %c0_i32 = arith.constant 0 : i32
    %c0_i32_0 = arith.constant 0 : i32
    %c0_i32_1 = arith.constant 0 : i32
    return %c0_i32, %c0_i32_0 : i32, i32
  }
  func.func @transform_6(%arg0: i32) -> (i32, i32) {
    %c0_i32 = arith.constant 0 : i32
    %c0_i32_0 = arith.constant 0 : i32
    %c0_i32_1 = arith.constant 0 : i32
    return %c0_i32, %c0_i32_0 : i32, i32
  }
  func.func @transform_7(%arg0: i32) -> (i32, i32) {
    %c0_i32 = arith.constant 0 : i32
    %c0_i32_0 = arith.constant 0 : i32
    %c0_i32_1 = arith.constant 0 : i32
    return %c0_i32, %c0_i32_0 : i32, i32
  }
  func.func @transform_8(%arg0: i32) -> (i32, i32, i32) {
    %c0_i32 = arith.constant 0 : i32
    %c0_i32_0 = arith.constant 0 : i32
    %c0_i32_1 = arith.constant 0 : i32
    %c0_i32_2 = arith.constant 0 : i32
    return %c0_i32, %c0_i32_0, %c0_i32_1 : i32, i32, i32
  }
  func.func @transform_9(%arg0: i32) -> (i32, i32) {
    %c0_i32 = arith.constant 0 : i32
    %c0_i32_0 = arith.constant 0 : i32
    %c0_i32_1 = arith.constant 0 : i32
    return %c0_i32, %c0_i32_0 : i32, i32
  }
  func.func @transform_10(%arg0: i32) -> (i32, i32) {
    %c0_i32 = arith.constant 0 : i32
    %c0_i32_0 = arith.constant 0 : i32
    return %arg0, %c0_i32 : i32, i32
  }
}

</mosaic_0001>

<llo_original>
// kernel: residual_soft_connection.1
$region0: #{residual_soft_connection.1}
  #allocation0 [shape = 'u32[]', space=smem, size = 0x4, offset = 0x4, fixed_abs, tag = 'smem constant byte address 0x4 - core index']
  #allocation1 [shape = 'u32[72,128]{1,0:T(1,128)}', space=vmem, size = 0x9000, scoped, tag = 'internal scratch']
  %s0 = inlined_call_operand.vmem [shape: f32[32,256], index: 0, kind: input, shape index: {}]
  %s1 = inlined_call_operand.vmem [shape: f32[2,1,256], index: 1, kind: input, shape index: {}]
  %s2 = inlined_call_operand.vmem [shape: f32[1,256], index: 2, kind: input, shape index: {}]
  %s3 = inlined_call_operand.vmem [shape: f32[1,256], index: 3, kind: input, shape index: {}]
  %s4 = inlined_call_operand.vmem [shape: f32[3,256,128], index: 4, kind: input, shape index: {}]
  %s5 = inlined_call_operand.vmem [shape: f32[1,128], index: 5, kind: input, shape index: {}]
  %s6 = inlined_call_operand.vmem [shape: f32[1,128], index: 6, kind: input, shape index: {}]
  %s7 = inlined_call_operand.vmem [shape: f32[1,128], index: 7, kind: input, shape index: {}]
  %s8 = inlined_call_operand.vmem [shape: f32[3,128,128], index: 8, kind: input, shape index: {}]
  %s9 = inlined_call_operand.vmem [shape: f32[1,128], index: 9, kind: input, shape index: {}]
  %s10 = inlined_call_operand.vmem [shape: f32[32,256], index: 10, kind: output, shape index: {}]
  %s11 = sld [smem:[#allocation0]]
  $region50: #{residual_soft_connection.1} parent=0
    _
  %s13 = ssub.s32 1, %s11
  %s14 = scalar_select 0, %s13, %s11
  // Predicated region
  $region2: #{residual_soft_connection.1} parent=0 // pred_check
    _
  $region3: #{residual_soft_connection.1} parent=0 // pred_check_branch
    %16 = sbr.rel (0) target = $region5
  $region4: #{residual_soft_connection.1} parent=0 // pred_region
    _
  $region5: #{residual_soft_connection.1} parent=0 // pred_fallthru
    _
  // Predicated region
  $region6: #{residual_soft_connection.1} parent=0 // pred_check
    _
  $region7: #{residual_soft_connection.1} parent=0 // pred_check_branch
    %18 = sbr.rel (0) target = $region9
  $region8: #{residual_soft_connection.1} parent=0 // pred_region
    _
  $region9: #{residual_soft_connection.1} parent=0 // pred_fallthru
    _
  // Predicated region
  $region10: #{residual_soft_connection.1} parent=0 // pred_check
    _
  $region11: #{residual_soft_connection.1} parent=0 // pred_check_branch
    %20 = sbr.rel (0) target = $region13
  $region12: #{residual_soft_connection.1} parent=0 // pred_region
    _
  $region13: #{residual_soft_connection.1} parent=0 // pred_fallthru
    _
  // Predicated region
  $region14: #{residual_soft_connection.1} parent=0 // pred_check
    _
  $region15: #{residual_soft_connection.1} parent=0 // pred_check_branch
    %22 = sbr.rel (0) target = $region17
  $region16: #{residual_soft_connection.1} parent=0 // pred_region
    _
  $region17: #{residual_soft_connection.1} parent=0 // pred_fallthru
    _
  // Predicated region
  $region18: #{residual_soft_connection.1} parent=0 // pred_check
    _
  $region19: #{residual_soft_connection.1} parent=0 // pred_check_branch
    %24 = sbr.rel (0) target = $region21
  $region20: #{residual_soft_connection.1} parent=0 // pred_region
    _
  $region21: #{residual_soft_connection.1} parent=0 // pred_fallthru
    _
  // Predicated region
  $region22: #{residual_soft_connection.1} parent=0 // pred_check
    _
  $region23: #{residual_soft_connection.1} parent=0 // pred_check_branch
    %26 = sbr.rel (0) target = $region25
  $region24: #{residual_soft_connection.1} parent=0 // pred_region
    _
  $region25: #{residual_soft_connection.1} parent=0 // pred_fallthru
    _
  // Predicated region
  $region26: #{residual_soft_connection.1} parent=0 // pred_check
    _
  $region27: #{residual_soft_connection.1} parent=0 // pred_check_branch
    %28 = sbr.rel (0) target = $region29
  $region28: #{residual_soft_connection.1} parent=0 // pred_region
    _
  $region29: #{residual_soft_connection.1} parent=0 // pred_fallthru
    _
  // Predicated region
  $region30: #{residual_soft_connection.1} parent=0 // pred_check
    _
  $region31: #{residual_soft_connection.1} parent=0 // pred_check_branch
    %30 = sbr.rel (0) target = $region33
  $region32: #{residual_soft_connection.1} parent=0 // pred_region
    _
  $region33: #{residual_soft_connection.1} parent=0 // pred_fallthru
    _
  // Predicated region
  $region34: #{residual_soft_connection.1} parent=0 // pred_check
    _
  $region35: #{residual_soft_connection.1} parent=0 // pred_check_branch
    %32 = sbr.rel (0) target = $region37
  $region36: #{residual_soft_connection.1} parent=0 // pred_region
    _
  $region37: #{residual_soft_connection.1} parent=0 // pred_fallthru
    _
  // Predicated region
  $region38: #{residual_soft_connection.1} parent=0 // pred_check
    _
  $region39: #{residual_soft_connection.1} parent=0 // pred_check_branch
    %34 = sbr.rel (0) target = $region41
  $region40: #{residual_soft_connection.1} parent=0 // pred_region
    _
  $region41: #{residual_soft_connection.1} parent=0 // pred_fallthru
    _
  %v35 = vld [vmem:[%s0] sm:$0xff]
  %v36 = vld [vmem:[%s0 + $0x8] sm:$0xff]
  %v37 = vld [vmem:[%s0 + $0x10] sm:$0xff]
  %v38 = vld [vmem:[%s0 + $0x18] sm:$0xff]
  %v39 = vld [vmem:[%s0 + $0x20] sm:$0xff]
  %v40 = vld [vmem:[%s0 + $0x28] sm:$0xff]
  %v41 = vld [vmem:[%s0 + $0x30] sm:$0xff]
  %v42 = vld [vmem:[%s0 + $0x38] sm:$0xff]
  %v43 = vld [vmem:[%s2] sm:$0x3]
  %v45 = vperm.slane %v43, 0
  %v46 = vperm.slane %v43, 1
  %v49 = vmul.f32 %v35, %v45
  %v50 = vmul.f32 %v36, %v46
  %v51 = vmul.f32 %v37, %v45
  %v52 = vmul.f32 %v38, %v46
  %v53 = vmul.f32 %v39, %v45
  %v54 = vmul.f32 %v40, %v46
  %v55 = vmul.f32 %v41, %v45
  %v56 = vmul.f32 %v42, %v46
  %v57 = vld [vmem:[%s3] sm:$0x3]
  %v59 = vperm.slane %v57, 0
  %v60 = vperm.slane %v57, 1
  %v63 = vadd.f32 %v49, %v59
  %v64 = vadd.f32 %v50, %v60
  %v65 = vadd.f32 %v51, %v59
  %v66 = vadd.f32 %v52, %v60
  %v67 = vadd.f32 %v53, %v59
  %v68 = vadd.f32 %v54, %v60
  %v69 = vadd.f32 %v55, %v59
  %v70 = vadd.f32 %v56, %v60
  %v71 = vmax.f32 %v63, 0.0
  %v72 = vmax.f32 %v64, 0.0
  %v73 = vmax.f32 %v65, 0.0
  %v74 = vmax.f32 %v66, 0.0
  %v75 = vmax.f32 %v67, 0.0
  %v76 = vmax.f32 %v68, 0.0
  %v77 = vmax.f32 %v69, 0.0
  %v78 = vmax.f32 %v70, 0.0
  %v79 = vld [vmem:[%s5] sm:$0x1]
  %v80 = vlaneseq
  %v81 = vshrl.u32 %v80, 7
  %v82 = vadd.s32 %v81, 8
  %v83 = vadd.s32 %v81, 16
  %v84 = vadd.s32 %v81, 24
  %vm85 = vcmp.lt.s32.totalorder %v81, 0
  %v86 = vsub.s32 0, %v81
  %v87 = vsel %vm85, %v86, %v81
  %v88 = vshrl.u32 %v87, 4
  %v89 = vand.u32 %v87, 15
  %v90 = vsub.s32 0, %v89
  %v91 = vsel %vm85, %v90, %v89
  %vm92 = vcmp.lt.s32.totalorder %v82, 0
  %v93 = vsub.s32 0, %v82
  %v94 = vsel %vm92, %v93, %v82
  %v95 = vshrl.u32 %v94, 4
  %v96 = vand.u32 %v94, 15
  %v97 = vsub.s32 0, %v96
  %v98 = vsel %vm92, %v97, %v96
  %vm99 = vcmp.lt.s32.totalorder %v83, 0
  %v100 = vsub.s32 0, %v83
  %v101 = vsel %vm99, %v100, %v83
  %v102 = vshrl.u32 %v101, 4
  %v103 = vand.u32 %v101, 15
  %v104 = vsub.s32 0, %v103
  %v105 = vsel %vm99, %v104, %v103
  %vm106 = vcmp.lt.s32.totalorder %v84, 0
  %v107 = vsub.s32 0, %v84
  %v108 = vsel %vm106, %v107, %v84
  %v109 = vshrl.u32 %v108, 4
  %v110 = vand.u32 %v108, 15
  %v111 = vsub.s32 0, %v110
  %v112 = vsel %vm106, %v111, %v110
  %vm113 = vcmp.ne.s32.totalorder %v91, 0
  %vm114 = vcmp.ne.s32.totalorder %v98, 0
  %vm115 = vcmp.ne.s32.totalorder %v105, 0
  %vm116 = vcmp.ne.s32.totalorder %v112, 0
  %vm117 = vcmp.lt.s32.totalorder %v91, 0
  %vm118 = vcmp.lt.s32.totalorder %v98, 0
  %vm119 = vcmp.lt.s32.totalorder %v105, 0
  %vm120 = vcmp.lt.s32.totalorder %v112, 0
  %vm121 = vmand %vm117, %vm113
  %vm122 = vmand %vm118, %vm114
  %vm123 = vmand %vm119, %vm115
  %vm124 = vmand %vm120, %vm116
  %v125 = vadd.s32 %v91, 16
  %v126 = vadd.s32 %v98, 16
  %v127 = vadd.s32 %v105, 16
  %v128 = vadd.s32 %v112, 16
  %v129 = vsel %vm121, %v125, %v91
  %v130 = vsel %vm122, %v126, %v98
  %v131 = vsel %vm123, %v127, %v105
  %v132 = vsel %vm124, %v128, %v112
  %vm133 = vcmp.ne.s32.totalorder %v129, 0
  %vm134 = vcmp.ne.s32.totalorder %v130, 0
  %vm135 = vcmp.ne.s32.totalorder %v131, 0
  %vm136 = vcmp.ne.s32.totalorder %v132, 0
  %v137 = vrot.slane %v71, 7
  %v138 = vrot.slane %v72, 7
  %v139 = vrot.slane %v73, 7
  %v140 = vrot.slane %v74, 7
  %v141 = vrot.slane %v75, 7
  %v142 = vrot.slane %v76, 7
  %v143 = vrot.slane %v77, 7
  %v144 = vrot.slane %v78, 7
  %vm145 = vcmp.lt.s32.totalorder %v81, 1
  %v146 = vsel %vm145, %v141, %v143
  %v147 = vsel %vm145, %v142, %v144
  %v148 = vsel %vm145, %v139, %v141
  %v149 = vsel %vm145, %v140, %v142
  %v150 = vsel %vm145, %v137, %v139
  %v151 = vsel %vm145, %v138, %v140
  %v152 = vsel %vm145, %v143, %v137
  %v153 = vsel %vm145, %v144, %v138
  %v154 = vsel %vm133, %v152, 0.0
  %v155 = vsel %vm133, %v153, 0.0
  %v156 = vsel %vm134, %v150, 0.0
  %v157 = vsel %vm134, %v151, 0.0
  %v158 = vsel %vm135, %v148, 0.0
  %v159 = vsel %vm135, %v149, 0.0
  %v160 = vsel %vm136, %v146, 0.0
  %v161 = vsel %vm136, %v147, 0.0
  %vm162 = vcmp.ne.s32.totalorder %v129, 15
  %vm163 = vcmp.ne.s32.totalorder %v130, 15
  %vm164 = vcmp.ne.s32.totalorder %v131, 15
  %vm165 = vcmp.ne.s32.totalorder %v132, 15
  %v166 = vrot.slane %v71, 1
  %v167 = vrot.slane %v72, 1
  %v168 = vrot.slane %v73, 1
  %v169 = vrot.slane %v74, 1
  %v170 = vrot.slane %v75, 1
  %v171 = vrot.slane %v76, 1
  %v172 = vrot.slane %v77, 1
  %v173 = vrot.slane %v78, 1
  %vm174 = vcmp.lt.s32.totalorder %v81, 7
  %v175 = vsel %vm174, %v170, %v172
  %v176 = vsel %vm174, %v171, %v173
  %v177 = vsel %vm174, %v168, %v170
  %v178 = vsel %vm174, %v169, %v171
  %v179 = vsel %vm174, %v166, %v168
  %v180 = vsel %vm174, %v167, %v169
  %v181 = vsel %vm174, %v172, %v166
  %v182 = vsel %vm174, %v173, %v167
  %v183 = vsel %vm162, %v179, 0.0
  %v184 = vsel %vm162, %v180, 0.0
  %v185 = vsel %vm163, %v177, 0.0
  %v186 = vsel %vm163, %v178, 0.0
  %v187 = vsel %vm164, %v175, 0.0
  %v188 = vsel %vm164, %v176, 0.0
  %v189 = vsel %vm165, %v181, 0.0
  %v190 = vsel %vm165, %v182, 0.0
  %v191 = vld [vmem:[%s4] sm:$0xff]
  %v192 = vld [vmem:[%s4 + $0x8] sm:$0xff]
  %v193 = vld [vmem:[%s4 + $0x10] sm:$0xff]
  %v194 = vld [vmem:[%s4 + $0x18] sm:$0xff]
  %v195 = vld [vmem:[%s4 + $0x20] sm:$0xff]
  %v196 = vld [vmem:[%s4 + $0x28] sm:$0xff]
  %v197 = vld [vmem:[%s4 + $0x30] sm:$0xff]
  %v198 = vld [vmem:[%s4 + $0x38] sm:$0xff]
  %v199 = vld [vmem:[%s4 + $0x40] sm:$0xff]
  %v200 = vld [vmem:[%s4 + $0x48] sm:$0xff]
  %v201 = vld [vmem:[%s4 + $0x50] sm:$0xff]
  %v202 = vld [vmem:[%s4 + $0x58] sm:$0xff]
  %v203 = vld [vmem:[%s4 + $0x60] sm:$0xff]
  %v204 = vld [vmem:[%s4 + $0x68] sm:$0xff]
  %v205 = vld [vmem:[%s4 + $0x70] sm:$0xff]
  %v206 = vld [vmem:[%s4 + $0x78] sm:$0xff]
  %v207 = vld [vmem:[%s4 + $0x80] sm:$0xff]
  %v208 = vld [vmem:[%s4 + $0x88] sm:$0xff]
  %v209 = vld [vmem:[%s4 + $0x90] sm:$0xff]
  %v210 = vld [vmem:[%s4 + $0x98] sm:$0xff]
  %v211 = vld [vmem:[%s4 + $0xa0] sm:$0xff]
  %v212 = vld [vmem:[%s4 + $0xa8] sm:$0xff]
  %v213 = vld [vmem:[%s4 + $0xb0] sm:$0xff]
  %v214 = vld [vmem:[%s4 + $0xb8] sm:$0xff]
  %v215 = vld [vmem:[%s4 + $0xc0] sm:$0xff]
  %v216 = vld [vmem:[%s4 + $0xc8] sm:$0xff]
  %v217 = vld [vmem:[%s4 + $0xd0] sm:$0xff]
  %v218 = vld [vmem:[%s4 + $0xd8] sm:$0xff]
  %v219 = vld [vmem:[%s4 + $0xe0] sm:$0xff]
  %v220 = vld [vmem:[%s4 + $0xe8] sm:$0xff]
  %v221 = vld [vmem:[%s4 + $0xf0] sm:$0xff]
  %v222 = vld [vmem:[%s4 + $0xf8] sm:$0xff]
  %s223 = scalar_lea.vmem %s4, 256
  %v224 = vld [vmem:[%s223] sm:$0xff]
  %v225 = vld [vmem:[%s223 + $0x8] sm:$0xff]
  %v226 = vld [vmem:[%s223 + $0x10] sm:$0xff]
  %v227 = vld [vmem:[%s223 + $0x18] sm:$0xff]
  %v228 = vld [vmem:[%s223 + $0x20] sm:$0xff]
  %v229 = vld [vmem:[%s223 + $0x28] sm:$0xff]
  %v230 = vld [vmem:[%s223 + $0x30] sm:$0xff]
  %v231 = vld [vmem:[%s223 + $0x38] sm:$0xff]
  %v232 = vld [vmem:[%s223 + $0x40] sm:$0xff]
  %v233 = vld [vmem:[%s223 + $0x48] sm:$0xff]
  %v234 = vld [vmem:[%s223 + $0x50] sm:$0xff]
  %v235 = vld [vmem:[%s223 + $0x58] sm:$0xff]
  %v236 = vld [vmem:[%s223 + $0x60] sm:$0xff]
  %v237 = vld [vmem:[%s223 + $0x68] sm:$0xff]
  %v238 = vld [vmem:[%s223 + $0x70] sm:$0xff]
  %v239 = vld [vmem:[%s223 + $0x78] sm:$0xff]
  %v240 = vld [vmem:[%s223 + $0x80] sm:$0xff]
  %v241 = vld [vmem:[%s223 + $0x88] sm:$0xff]
  %v242 = vld [vmem:[%s223 + $0x90] sm:$0xff]
  %v243 = vld [vmem:[%s223 + $0x98] sm:$0xff]
  %v244 = vld [vmem:[%s223 + $0xa0] sm:$0xff]
  %v245 = vld [vmem:[%s223 + $0xa8] sm:$0xff]
  %v246 = vld [vmem:[%s223 + $0xb0] sm:$0xff]
  %v247 = vld [vmem:[%s223 + $0xb8] sm:$0xff]
  %v248 = vld [vmem:[%s223 + $0xc0] sm:$0xff]
  %v249 = vld [vmem:[%s223 + $0xc8] sm:$0xff]
  %v250 = vld [vmem:[%s223 + $0xd0] sm:$0xff]
  %v251 = vld [vmem:[%s223 + $0xd8] sm:$0xff]
  %v252 = vld [vmem:[%s223 + $0xe0] sm:$0xff]
  %v253 = vld [vmem:[%s223 + $0xe8] sm:$0xff]
  %v254 = vld [vmem:[%s223 + $0xf0] sm:$0xff]
  %v255 = vld [vmem:[%s223 + $0xf8] sm:$0xff]
  %256 = vmatpush.msra.mxu0 %v239
  %257 = vmatpush.msra.mxu0 %v238
  %258 = vmatpush.msra.mxu0 %v237
  %259 = vmatpush.msra.mxu0 %v236
  %260 = vmatpush.msra.mxu0 %v235
  %261 = vmatpush.msra.mxu0 %v234
  %262 = vmatpush.msra.mxu0 %v233
  %263 = vmatpush.msra.mxu0 %v232
  %264 = vmatpush.msra.mxu0 %v231
  %265 = vmatpush.msra.mxu0 %v230
  %266 = vmatpush.msra.mxu0 %v229
  %267 = vmatpush.msra.mxu0 %v228
  %268 = vmatpush.msra.mxu0 %v227
  %269 = vmatpush.msra.mxu0 %v226
  %270 = vmatpush.msra.mxu0 %v225
  %271 = vmatpush.msra.mxu0 %v224
  %272 = vmatmul.f32.gmra.mxu0 %v71
  %v273 = vpop.f32.mrf.mxu0
  %v274 = vadd.f32 0.0, %v273
  %275 = vmatmul.f32.gmra.mxu0 %v73
  %v276 = vpop.f32.mrf.mxu0
  %v277 = vadd.f32 0.0, %v276
  %278 = vmatmul.f32.gmra.mxu0 %v75
  %v279 = vpop.f32.mrf.mxu0
  %v280 = vadd.f32 0.0, %v279
  %281 = vmatmul.f32.gmra.mxu0 %v77
  %v282 = vpop.f32.mrf.mxu0
  %v283 = vadd.f32 0.0, %v282
  %284 = vdwg.mxu0
  %285 = vmatpush.msra.mxu0 %v255
  %286 = vmatpush.msra.mxu0 %v254
  %287 = vmatpush.msra.mxu0 %v253
  %288 = vmatpush.msra.mxu0 %v252
  %289 = vmatpush.msra.mxu0 %v251
  %290 = vmatpush.msra.mxu0 %v250
  %291 = vmatpush.msra.mxu0 %v249
  %292 = vmatpush.msra.mxu0 %v248
  %293 = vmatpush.msra.mxu0 %v247
  %294 = vmatpush.msra.mxu0 %v246
  %295 = vmatpush.msra.mxu0 %v245
  %296 = vmatpush.msra.mxu0 %v244
  %297 = vmatpush.msra.mxu0 %v243
  %298 = vmatpush.msra.mxu0 %v242
  %299 = vmatpush.msra.mxu0 %v241
  %300 = vmatpush.msra.mxu0 %v240
  %301 = vmatmul.f32.gmra.mxu0 %v72
  %v302 = vpop.f32.mrf.mxu0
  %v303 = vadd.f32 %v274, %v302
  %304 = vmatmul.f32.gmra.mxu0 %v74
  %v305 = vpop.f32.mrf.mxu0
  %v306 = vadd.f32 %v277, %v305
  %307 = vmatmul.f32.gmra.mxu0 %v76
  %v308 = vpop.f32.mrf.mxu0
  %v309 = vadd.f32 %v280, %v308
  %310 = vmatmul.f32.gmra.mxu0 %v78
  %v311 = vpop.f32.mrf.mxu0
  %v312 = vadd.f32 %v283, %v311
  %313 = vdwg.mxu0
  %314 = vmatpush.msra.mxu0 %v206
  %315 = vmatpush.msra.mxu0 %v205
  %316 = vmatpush.msra.mxu0 %v204
  %317 = vmatpush.msra.mxu0 %v203
  %318 = vmatpush.msra.mxu0 %v202
  %319 = vmatpush.msra.mxu0 %v201
  %320 = vmatpush.msra.mxu0 %v200
  %321 = vmatpush.msra.mxu0 %v199
  %322 = vmatpush.msra.mxu0 %v198
  %323 = vmatpush.msra.mxu0 %v197
  %324 = vmatpush.msra.mxu0 %v196
  %325 = vmatpush.msra.mxu0 %v195
  %326 = vmatpush.msra.mxu0 %v194
  %327 = vmatpush.msra.mxu0 %v193
  %328 = vmatpush.msra.mxu0 %v192
  %329 = vmatpush.msra.mxu0 %v191
  %330 = vmatmul.f32.gmra.mxu0 %v154
  %v331 = vpop.f32.mrf.mxu0
  %v332 = vadd.f32 %v303, %v331
  %333 = vmatmul.f32.gmra.mxu0 %v156
  %v334 = vpop.f32.mrf.mxu0
  %v335 = vadd.f32 %v306, %v334
  %336 = vmatmul.f32.gmra.mxu0 %v158
  %v337 = vpop.f32.mrf.mxu0
  %v338 = vadd.f32 %v309, %v337
  %339 = vmatmul.f32.gmra.mxu0 %v160
  %v340 = vpop.f32.mrf.mxu0
  %v341 = vadd.f32 %v312, %v340
  %342 = vdwg.mxu0
  %343 = vmatpush.msra.mxu0 %v222
  %344 = vmatpush.msra.mxu0 %v221
  %345 = vmatpush.msra.mxu0 %v220
  %346 = vmatpush.msra.mxu0 %v219
  %347 = vmatpush.msra.mxu0 %v218
  %348 = vmatpush.msra.mxu0 %v217
  %349 = vmatpush.msra.mxu0 %v216
  %350 = vmatpush.msra.mxu0 %v215
  %351 = vmatpush.msra.mxu0 %v214
  %352 = vmatpush.msra.mxu0 %v213
  %353 = vmatpush.msra.mxu0 %v212
  %354 = vmatpush.msra.mxu0 %v211
  %355 = vmatpush.msra.mxu0 %v210
  %356 = vmatpush.msra.mxu0 %v209
  %357 = vmatpush.msra.mxu0 %v208
  %358 = vmatpush.msra.mxu0 %v207
  %359 = vmatmul.f32.gmra.mxu0 %v155
  %v360 = vpop.f32.mrf.mxu0
  %v361 = vadd.f32 %v332, %v360
  %362 = vmatmul.f32.gmra.mxu0 %v157
  %v363 = vpop.f32.mrf.mxu0
  %v364 = vadd.f32 %v335, %v363
  %365 = vmatmul.f32.gmra.mxu0 %v159
  %v366 = vpop.f32.mrf.mxu0
  %v367 = vadd.f32 %v338, %v366
  %368 = vmatmul.f32.gmra.mxu0 %v161
  %v369 = vpop.f32.mrf.mxu0
  %v370 = vadd.f32 %v341, %v369
  %371 = vdwg.mxu0
  %s372 = scalar_lea.vmem %s4, 512
  %v373 = vld [vmem:[%s372] sm:$0xff]
  %v374 = vld [vmem:[%s372 + $0x8] sm:$0xff]
  %v375 = vld [vmem:[%s372 + $0x10] sm:$0xff]
  %v376 = vld [vmem:[%s372 + $0x18] sm:$0xff]
  %v377 = vld [vmem:[%s372 + $0x20] sm:$0xff]
  %v378 = vld [vmem:[%s372 + $0x28] sm:$0xff]
  %v379 = vld [vmem:[%s372 + $0x30] sm:$0xff]
  %v380 = vld [vmem:[%s372 + $0x38] sm:$0xff]
  %v381 = vld [vmem:[%s372 + $0x40] sm:$0xff]
  %v382 = vld [vmem:[%s372 + $0x48] sm:$0xff]
  %v383 = vld [vmem:[%s372 + $0x50] sm:$0xff]
  %v384 = vld [vmem:[%s372 + $0x58] sm:$0xff]
  %v385 = vld [vmem:[%s372 + $0x60] sm:$0xff]
  %v386 = vld [vmem:[%s372 + $0x68] sm:$0xff]
  %v387 = vld [vmem:[%s372 + $0x70] sm:$0xff]
  %v388 = vld [vmem:[%s372 + $0x78] sm:$0xff]
  %v389 = vld [vmem:[%s372 + $0x80] sm:$0xff]
  %v390 = vld [vmem:[%s372 + $0x88] sm:$0xff]
  %v391 = vld [vmem:[%s372 + $0x90] sm:$0xff]
  %v392 = vld [vmem:[%s372 + $0x98] sm:$0xff]
  %v393 = vld [vmem:[%s372 + $0xa0] sm:$0xff]
  %v394 = vld [vmem:[%s372 + $0xa8] sm:$0xff]
  %v395 = vld [vmem:[%s372 + $0xb0] sm:$0xff]
  %v396 = vld [vmem:[%s372 + $0xb8] sm:$0xff]
  %v397 = vld [vmem:[%s372 + $0xc0] sm:$0xff]
  %v398 = vld [vmem:[%s372 + $0xc8] sm:$0xff]
  %v399 = vld [vmem:[%s372 + $0xd0] sm:$0xff]
  %v400 = vld [vmem:[%s372 + $0xd8] sm:$0xff]
  %v401 = vld [vmem:[%s372 + $0xe0] sm:$0xff]
  %v402 = vld [vmem:[%s372 + $0xe8] sm:$0xff]
  %v403 = vld [vmem:[%s372 + $0xf0] sm:$0xff]
  %v404 = vld [vmem:[%s372 + $0xf8] sm:$0xff]
  %405 = vmatpush.msra.mxu0 %v388
  %406 = vmatpush.msra.mxu0 %v387
  %407 = vmatpush.msra.mxu0 %v386
  %408 = vmatpush.msra.mxu0 %v385
  %409 = vmatpush.msra.mxu0 %v384
  %410 = vmatpush.msra.mxu0 %v383
  %411 = vmatpush.msra.mxu0 %v382
  %412 = vmatpush.msra.mxu0 %v381
  %413 = vmatpush.msra.mxu0 %v380
  %414 = vmatpush.msra.mxu0 %v379
  %415 = vmatpush.msra.mxu0 %v378
  %416 = vmatpush.msra.mxu0 %v377
  %417 = vmatpush.msra.mxu0 %v376
  %418 = vmatpush.msra.mxu0 %v375
  %419 = vmatpush.msra.mxu0 %v374
  %420 = vmatpush.msra.mxu0 %v373
  %421 = vmatmul.f32.gmra.mxu0 %v183
  %v422 = vpop.f32.mrf.mxu0
  %v423 = vadd.f32 0.0, %v422
  %424 = vmatmul.f32.gmra.mxu0 %v185
  %v425 = vpop.f32.mrf.mxu0
  %v426 = vadd.f32 0.0, %v425
  %427 = vmatmul.f32.gmra.mxu0 %v187
  %v428 = vpop.f32.mrf.mxu0
  %v429 = vadd.f32 0.0, %v428
  %430 = vmatmul.f32.gmra.mxu0 %v189
  %v431 = vpop.f32.mrf.mxu0
  %v432 = vadd.f32 0.0, %v431
  %433 = vdwg.mxu0
  %434 = vmatpush.msra.mxu0 %v404
  %435 = vmatpush.msra.mxu0 %v403
  %436 = vmatpush.msra.mxu0 %v402
  %437 = vmatpush.msra.mxu0 %v401
  %438 = vmatpush.msra.mxu0 %v400
  %439 = vmatpush.msra.mxu0 %v399
  %440 = vmatpush.msra.mxu0 %v398
  %441 = vmatpush.msra.mxu0 %v397
  %442 = vmatpush.msra.mxu0 %v396
  %443 = vmatpush.msra.mxu0 %v395
  %444 = vmatpush.msra.mxu0 %v394
  %445 = vmatpush.msra.mxu0 %v393
  %446 = vmatpush.msra.mxu0 %v392
  %447 = vmatpush.msra.mxu0 %v391
  %448 = vmatpush.msra.mxu0 %v390
  %449 = vmatpush.msra.mxu0 %v389
  %450 = vmatmul.f32.gmra.mxu0 %v184
  %v451 = vpop.f32.mrf.mxu0
  %v452 = vadd.f32 %v423, %v451
  %453 = vmatmul.f32.gmra.mxu0 %v186
  %v454 = vpop.f32.mrf.mxu0
  %v455 = vadd.f32 %v426, %v454
  %456 = vmatmul.f32.gmra.mxu0 %v188
  %v457 = vpop.f32.mrf.mxu0
  %v458 = vadd.f32 %v429, %v457
  %459 = vmatmul.f32.gmra.mxu0 %v190
  %v460 = vpop.f32.mrf.mxu0
  %v461 = vadd.f32 %v432, %v460
  %462 = vdwg.mxu0
  %v463 = vadd.f32 %v361, %v452
  %v464 = vadd.f32 %v364, %v455
  %v465 = vadd.f32 %v367, %v458
  %v466 = vadd.f32 %v370, %v461
  %v468 = vperm.slane %v79, 0
  %v470 = vadd.f32 %v463, %v468
  %v471 = vadd.f32 %v464, %v468
  %v472 = vadd.f32 %v465, %v468
  %v473 = vadd.f32 %v466, %v468
  %v474 = vld [vmem:[%s6] sm:$0x1]
  %v476 = vperm.slane %v474, 0
  %v478 = vmul.f32 %v470, %v476
  %v479 = vmul.f32 %v471, %v476
  %v480 = vmul.f32 %v472, %v476
  %v481 = vmul.f32 %v473, %v476
  %v482 = vld [vmem:[%s7] sm:$0x1]
  %v484 = vperm.slane %v482, 0
  %v486 = vadd.f32 %v478, %v484
  %v487 = vadd.f32 %v479, %v484
  %v488 = vadd.f32 %v480, %v484
  %v489 = vadd.f32 %v481, %v484
  %v490 = vmax.f32 %v486, 0.0
  %v491 = vmax.f32 %v487, 0.0
  %v492 = vmax.f32 %v488, 0.0
  %v493 = vmax.f32 %v489, 0.0
  %v494 = vld [vmem:[%s9] sm:$0x1]
  %v495 = vrot.slane %v490, 7
  %v496 = vrot.slane %v491, 7
  %v497 = vrot.slane %v492, 7
  %v498 = vrot.slane %v493, 7
  %v499 = vsel %vm145, %v497, %v498
  %v500 = vsel %vm145, %v496, %v497
  %v501 = vsel %vm145, %v495, %v496
  %v502 = vsel %vm145, %v498, %v495
  %v503 = vsel %vm133, %v502, 0.0
  %v504 = vsel %vm134, %v501, 0.0
  %v505 = vsel %vm135, %v500, 0.0
  %v506 = vsel %vm136, %v499, 0.0
  %v507 = vrot.slane %v490, 1
  %v508 = vrot.slane %v491, 1
  %v509 = vrot.slane %v492, 1
  %v510 = vrot.slane %v493, 1
  %v511 = vsel %vm174, %v509, %v510
  %v512 = vsel %vm174, %v508, %v509
  %v513 = vsel %vm174, %v507, %v508
  %v514 = vsel %vm174, %v510, %v507
  %v515 = vsel %vm162, %v513, 0.0
  %v516 = vsel %vm163, %v512, 0.0
  %v517 = vsel %vm164, %v511, 0.0
  %v518 = vsel %vm165, %v514, 0.0
  %v519 = vld [vmem:[%s8] sm:$0xff]
  %v520 = vld [vmem:[%s8 + $0x8] sm:$0xff]
  %v521 = vld [vmem:[%s8 + $0x10] sm:$0xff]
  %v522 = vld [vmem:[%s8 + $0x18] sm:$0xff]
  %v523 = vld [vmem:[%s8 + $0x20] sm:$0xff]
  %v524 = vld [vmem:[%s8 + $0x28] sm:$0xff]
  %v525 = vld [vmem:[%s8 + $0x30] sm:$0xff]
  %v526 = vld [vmem:[%s8 + $0x38] sm:$0xff]
  %v527 = vld [vmem:[%s8 + $0x40] sm:$0xff]
  %v528 = vld [vmem:[%s8 + $0x48] sm:$0xff]
  %v529 = vld [vmem:[%s8 + $0x50] sm:$0xff]
  %v530 = vld [vmem:[%s8 + $0x58] sm:$0xff]
  %v531 = vld [vmem:[%s8 + $0x60] sm:$0xff]
  %v532 = vld [vmem:[%s8 + $0x68] sm:$0xff]
  %v533 = vld [vmem:[%s8 + $0x70] sm:$0xff]
  %v534 = vld [vmem:[%s8 + $0x78] sm:$0xff]
  %s535 = scalar_lea.vmem %s8, 128
  %v536 = vld [vmem:[%s535] sm:$0xff]
  %v537 = vld [vmem:[%s535 + $0x8] sm:$0xff]
  %v538 = vld [vmem:[%s535 + $0x10] sm:$0xff]
  %v539 = vld [vmem:[%s535 + $0x18] sm:$0xff]
  %v540 = vld [vmem:[%s535 + $0x20] sm:$0xff]
  %v541 = vld [vmem:[%s535 + $0x28] sm:$0xff]
  %v542 = vld [vmem:[%s535 + $0x30] sm:$0xff]
  %v543 = vld [vmem:[%s535 + $0x38] sm:$0xff]
  %v544 = vld [vmem:[%s535 + $0x40] sm:$0xff]
  %v545 = vld [vmem:[%s535 + $0x48] sm:$0xff]
  %v546 = vld [vmem:[%s535 + $0x50] sm:$0xff]
  %v547 = vld [vmem:[%s535 + $0x58] sm:$0xff]
  %v548 = vld [vmem:[%s535 + $0x60] sm:$0xff]
  %v549 = vld [vmem:[%s535 + $0x68] sm:$0xff]
  %v550 = vld [vmem:[%s535 + $0x70] sm:$0xff]
  %v551 = vld [vmem:[%s535 + $0x78] sm:$0xff]
  %552 = vmatpush.msra.mxu0 %v551
  %553 = vmatpush.msra.mxu0 %v550
  %554 = vmatpush.msra.mxu0 %v549
  %555 = vmatpush.msra.mxu0 %v548
  %556 = vmatpush.msra.mxu0 %v547
  %557 = vmatpush.msra.mxu0 %v546
  %558 = vmatpush.msra.mxu0 %v545
  %559 = vmatpush.msra.mxu0 %v544
  %560 = vmatpush.msra.mxu0 %v543
  %561 = vmatpush.msra.mxu0 %v542
  %562 = vmatpush.msra.mxu0 %v541
  %563 = vmatpush.msra.mxu0 %v540
  %564 = vmatpush.msra.mxu0 %v539
  %565 = vmatpush.msra.mxu0 %v538
  %566 = vmatpush.msra.mxu0 %v537
  %567 = vmatpush.msra.mxu0 %v536
  %568 = vmatmul.f32.gmra.mxu0 %v490
  %v569 = vpop.f32.mrf.mxu0
  %v570 = vadd.f32 0.0, %v569
  %571 = vmatmul.f32.gmra.mxu0 %v491
  %v572 = vpop.f32.mrf.mxu0
  %v573 = vadd.f32 0.0, %v572
  %574 = vmatmul.f32.gmra.mxu0 %v492
  %v575 = vpop.f32.mrf.mxu0
  %v576 = vadd.f32 0.0, %v575
  %577 = vmatmul.f32.gmra.mxu0 %v493
  %v578 = vpop.f32.mrf.mxu0
  %v579 = vadd.f32 0.0, %v578
  %580 = vdwg.mxu0
  %581 = vmatpush.msra.mxu0 %v534
  %582 = vmatpush.msra.mxu0 %v533
  %583 = vmatpush.msra.mxu0 %v532
  %584 = vmatpush.msra.mxu0 %v531
  %585 = vmatpush.msra.mxu0 %v530
  %586 = vmatpush.msra.mxu0 %v529
  %587 = vmatpush.msra.mxu0 %v528
  %588 = vmatpush.msra.mxu0 %v527
  %589 = vmatpush.msra.mxu0 %v526
  %590 = vmatpush.msra.mxu0 %v525
  %591 = vmatpush.msra.mxu0 %v524
  %592 = vmatpush.msra.mxu0 %v523
  %593 = vmatpush.msra.mxu0 %v522
  %594 = vmatpush.msra.mxu0 %v521
  %595 = vmatpush.msra.mxu0 %v520
  %596 = vmatpush.msra.mxu0 %v519
  %597 = vmatmul.f32.gmra.mxu0 %v503
  %v598 = vpop.f32.mrf.mxu0
  %v599 = vadd.f32 %v570, %v598
  %600 = vmatmul.f32.gmra.mxu0 %v504
  %v601 = vpop.f32.mrf.mxu0
  %v602 = vadd.f32 %v573, %v601
  %603 = vmatmul.f32.gmra.mxu0 %v505
  %v604 = vpop.f32.mrf.mxu0
  %v605 = vadd.f32 %v576, %v604
  %606 = vmatmul.f32.gmra.mxu0 %v506
  %v607 = vpop.f32.mrf.mxu0
  %v608 = vadd.f32 %v579, %v607
  %609 = vdwg.mxu0
  %s610 = scalar_lea.vmem %s8, 256
  %v611 = vld [vmem:[%s610] sm:$0xff]
  %v612 = vld [vmem:[%s610 + $0x8] sm:$0xff]
  %v613 = vld [vmem:[%s610 + $0x10] sm:$0xff]
  %v614 = vld [vmem:[%s610 + $0x18] sm:$0xff]
  %v615 = vld [vmem:[%s610 + $0x20] sm:$0xff]
  %v616 = vld [vmem:[%s610 + $0x28] sm:$0xff]
  %v617 = vld [vmem:[%s610 + $0x30] sm:$0xff]
  %v618 = vld [vmem:[%s610 + $0x38] sm:$0xff]
  %v619 = vld [vmem:[%s610 + $0x40] sm:$0xff]
  %v620 = vld [vmem:[%s610 + $0x48] sm:$0xff]
  %v621 = vld [vmem:[%s610 + $0x50] sm:$0xff]
  %v622 = vld [vmem:[%s610 + $0x58] sm:$0xff]
  %v623 = vld [vmem:[%s610 + $0x60] sm:$0xff]
  %v624 = vld [vmem:[%s610 + $0x68] sm:$0xff]
  %v625 = vld [vmem:[%s610 + $0x70] sm:$0xff]
  %v626 = vld [vmem:[%s610 + $0x78] sm:$0xff]
  %627 = vmatpush.msra.mxu0 %v626
  %628 = vmatpush.msra.mxu0 %v625
  %629 = vmatpush.msra.mxu0 %v624
  %630 = vmatpush.msra.mxu0 %v623
  %631 = vmatpush.msra.mxu0 %v622
  %632 = vmatpush.msra.mxu0 %v621
  %633 = vmatpush.msra.mxu0 %v620
  %634 = vmatpush.msra.mxu0 %v619
  %635 = vmatpush.msra.mxu0 %v618
  %636 = vmatpush.msra.mxu0 %v617
  %637 = vmatpush.msra.mxu0 %v616
  %638 = vmatpush.msra.mxu0 %v615
  %639 = vmatpush.msra.mxu0 %v614
  %640 = vmatpush.msra.mxu0 %v613
  %641 = vmatpush.msra.mxu0 %v612
  %642 = vmatpush.msra.mxu0 %v611
  %643 = vmatmul.f32.gmra.mxu0 %v515
  %v644 = vpop.f32.mrf.mxu0
  %v645 = vadd.f32 0.0, %v644
  %646 = vmatmul.f32.gmra.mxu0 %v516
  %v647 = vpop.f32.mrf.mxu0
  %v648 = vadd.f32 0.0, %v647
  %649 = vmatmul.f32.gmra.mxu0 %v517
  %v650 = vpop.f32.mrf.mxu0
  %v651 = vadd.f32 0.0, %v650
  %652 = vmatmul.f32.gmra.mxu0 %v518
  %v653 = vpop.f32.mrf.mxu0
  %v654 = vadd.f32 0.0, %v653
  %655 = vdwg.mxu0
  %v656 = vadd.f32 %v599, %v645
  %v657 = vadd.f32 %v602, %v648
  %v658 = vadd.f32 %v605, %v651
  %v659 = vadd.f32 %v608, %v654
  %v661 = vperm.slane %v494, 0
  %v663 = vadd.f32 %v656, %v661
  %v664 = vadd.f32 %v657, %v661
  %v665 = vadd.f32 %v658, %v661
  %v666 = vadd.f32 %v659, %v661
  %v667 = vld [vmem:[%s1] sm:$0x3]
  %v668 = vld [vmem:[%s1 + $0x2] sm:$0x3]
  %v671 = vperm.slane %v667, 0
  %v672 = vperm.slane %v667, 1
  %v673 = vperm.slane %v668, 0
  %v674 = vperm.slane %v668, 1
  %v679 = vmul.f32 %v35, %v671
  %v680 = vmul.f32 %v36, %v672
  %v681 = vmul.f32 %v37, %v671
  %v682 = vmul.f32 %v38, %v672
  %v683 = vmul.f32 %v39, %v673
  %v684 = vmul.f32 %v40, %v674
  %v685 = vmul.f32 %v41, %v673
  %v686 = vmul.f32 %v42, %v674
  %v687 = vadd.f32 %v470, %v679
  %v688 = vadd.f32 %v663, %v680
  %v689 = vadd.f32 %v471, %v681
  %v690 = vadd.f32 %v664, %v682
  %v691 = vadd.f32 %v472, %v683
  %v692 = vadd.f32 %v665, %v684
  %v693 = vadd.f32 %v473, %v685
  %v694 = vadd.f32 %v666, %v686
  %695 = vst [vmem:[%s10] sm:$0xff] %v687
  %696 = vst [vmem:[%s10 + $0x8] sm:$0xff] %v688
  %697 = vst [vmem:[%s10 + $0x10] sm:$0xff] %v689
  %698 = vst [vmem:[%s10 + $0x18] sm:$0xff] %v690
  %699 = vst [vmem:[%s10 + $0x20] sm:$0xff] %v691
  %700 = vst [vmem:[%s10 + $0x28] sm:$0xff] %v692
  %701 = vst [vmem:[%s10 + $0x30] sm:$0xff] %v693
  %702 = vst [vmem:[%s10 + $0x38] sm:$0xff] %v694
  // Predicated region
  $region42: #{residual_soft_connection.1} parent=0 // pred_check
    _
  $region43: #{residual_soft_connection.1} parent=0 // pred_check_branch
    %704 = sbr.rel (0) target = $region45
  $region44: #{residual_soft_connection.1} parent=0 // pred_region
    _
  $region45: #{residual_soft_connection.1} parent=0 // pred_fallthru
    _
  // Predicated region
  $region46: #{residual_soft_connection.1} parent=0 // pred_check
    _
  $region47: #{residual_soft_connection.1} parent=0 // pred_check_branch
    %706 = sbr.rel (0) target = $region49
  $region48: #{residual_soft_connection.1} parent=0 // pred_region
    _
  $region49: #{residual_soft_connection.1} parent=0 // pred_fallthru
    _

</llo_original>
